<compile_context>
chip_gen: v7x
topology: tpu7x:2x2x1
jax: 0.10.0
libtpu: 0.0.40
codegen_flags: <defaults>
</compile_context>

<pallas_src>
import functools
import math

import jax
import jax.numpy as jnp
from jax.experimental import pallas as pl
from jax.experimental.pallas import tpu as pltpu

ALPHA = 100.0
BIAS = 0.01
LANE = 128


def _init_loss_kernel(outS_ref, outT_ref, tgt_ref, acc_ref, *,
                      alpha, bias, tm, bpc, rows, ragged):
    """Accumulates an (8,128) partial sum of (outS-target)^2 * wei'^2.

    wei' = 1/(1+exp((err-bias)*alpha)); the constant 1/wei0 scaling is folded
    into the wrapper (MSE is quadratic in wei, so a single scalar multiply).
    """
    c = pl.program_id(0)   # core-split index ("parallel")
    j = pl.program_id(1)   # reduction step within the split ("arbitrary")

    @pl.when(j == 0)
    def _():
        acc_ref[...] = jnp.zeros_like(acc_ref)

    outS = outS_ref[...].astype(jnp.float32)
    outT = outT_ref[...].astype(jnp.float32)
    tgt = tgt_ref[...].astype(jnp.float32)

    err = jnp.abs(outT - tgt)
    # exp overflows to +inf for err >~ 0.9 (alpha=100); exact 1/(1+inf) = 0,
    # matching the PyTorch limit, so keep the exact division (not approx vrcp).
    wei = 1.0 / (1.0 + jnp.exp((err - bias) * alpha))

    diff = (outS - tgt) * wei          # == outS*wei - target*wei
    sq = diff * diff

    if ragged:
        # Mask rows of the (possibly partial) last block that lie past the
        # real array; out-of-bounds block contents are unspecified.
        g = c * bpc + j                                   # global block index
        row = jax.lax.broadcasted_iota(jnp.int32, (tm, LANE), 0) + g * tm
        sq = jnp.where(row < rows, sq, 0.0)

    # Sublane-group fold: (tm,128) -> (tm//8, 8, 128), reduce leading axis.
    # Pure VPU adds; the single cross-lane reduce happens in the wrapper.
    acc_ref[...] += sq.reshape(tm // 8, 8, LANE).sum(axis=0)


def init_loss(outS, outT, target, *, size_average=True,
              alpha=ALPHA, bias=BIAS, block_rows=2048):
    assert outS.shape == outT.shape == target.shape
    n_elem = outS.size
    wei0 = 1.0 / (1.0 + math.exp(-bias * alpha))

    # Keep native dtype (cast happens in-kernel); reshape of contiguous data is free.
    flat_s = outS.reshape(-1)
    flat_t = outT.reshape(-1)
    flat_g = target.reshape(-1)

    # Sublane granularity so blocks tile cleanly for sub-32-bit dtypes too.
    itemsize = jnp.dtype(outS.dtype).itemsize
    sub = 8 * max(1, 4 // itemsize)
    chunk = sub * LANE
    pad = (-n_elem) % chunk
    if pad:
        # Only taken for ragged element counts; zero padding contributes
        # exactly 0 to the sum (err=0 -> finite wei, diff=0).
        flat_s = jnp.pad(flat_s, (0, pad))
        flat_t = jnp.pad(flat_t, (0, pad))
        flat_g = jnp.pad(flat_g, (0, pad))

    rows = (n_elem + pad) // LANE
    a = flat_s.reshape(rows, LANE)
    b = flat_t.reshape(rows, LANE)
    g = flat_g.reshape(rows, LANE)

    block_rows = max(sub, (int(block_rows) // sub) * sub)
    tm = min(block_rows, rows)
    total_blocks = (rows + tm - 1) // tm
    nsplit = 2 if (total_blocks % 2 == 0) else 1   # 2 partials -> both v7x TCs
    bpc = total_blocks // nsplit
    ragged = (rows % tm) != 0

    kernel = functools.partial(
        _init_loss_kernel,
        alpha=float(alpha), bias=float(bias),
        tm=int(tm), bpc=int(bpc), rows=int(rows), ragged=bool(ragged))

    in_spec = pl.BlockSpec((tm, LANE), lambda c, j: (c * bpc + j, 0))

    partials = pl.pallas_call(
        kernel,
        out_shape=jax.ShapeDtypeStruct((nsplit, 8, LANE), jnp.float32),
        grid_spec=pltpu.PrefetchScalarGridSpec(
            num_scalar_prefetch=0,
            grid=(nsplit, bpc),
            in_specs=[in_spec, in_spec, in_spec],
            out_specs=pl.BlockSpec((None, 8, LANE), lambda c, j: (c, 0, 0)),
        ),
        compiler_params=pltpu.CompilerParams(
            dimension_semantics=("parallel", "arbitrary"),
            vmem_limit_bytes=32 * 1024 * 1024),
    )(a, b, g)

    # Final cross-lane reduce + folded 1/wei0^2 scaling + mean, all tiny.
    total = jnp.sum(partials) / jnp.float32(wei0 * wei0)
    if size_average:
        return total / jnp.float32(n_elem)
    return total


def _ref_loss(outS, outT, target, size_average=True, alpha=ALPHA, bias=BIAS):
    """Pure-JAX reference matching the PyTorch module."""
    wei0 = 1.0 / (1.0 + jnp.exp(jnp.float32(-bias * alpha)))
    err = jnp.abs(outT - target)
    wei = 1.0 / (1.0 + jnp.exp((err - bias) * alpha))
    wei = wei / wei0
    out = outS * wei
    tgt = target * wei
    sq = (out - tgt) ** 2
    return jnp.mean(sq) if size_average else jnp.sum(sq)


if __name__ == "__main__":
    key = jax.random.PRNGKey(0)
    k1, k2, k3 = jax.random.split(key, 3)

    # Case 1: NCHW shape like the PyTorch module (divisible -> zero wrapper copies).
    shape = (2, 4, 16, 16)
    outS = jax.random.normal(k1, shape, dtype=jnp.float32)
    outT = jax.random.uniform(k2, shape, dtype=jnp.float32)
    target = (jax.random.uniform(k3, shape, dtype=jnp.float32) > 0.5
              ).astype(jnp.float32)

    loss = init_loss(outS, outT, target, size_average=True)
    jax.block_until_ready(loss)
    ref = _ref_loss(outS, outT, target, size_average=True)
    assert jnp.allclose(loss, ref, rtol=1e-5, atol=1e-6), (loss, ref)

    # Case 2: exercises the 2-way core split and the ragged-last-block mask.
    shape2 = (3, 8, 128)
    s2 = jax.random.normal(k1, shape2, dtype=jnp.float32)
    t2 = jax.random.uniform(k2, shape2, dtype=jnp.float32)
    g2 = (jax.random.uniform(k3, shape2, dtype=jnp.float32) > 0.5
          ).astype(jnp.float32)
    loss2 = init_loss(s2, t2, g2, size_average=True, block_rows=16)
    jax.block_until_ready(loss2)
    ref2 = _ref_loss(s2, t2, g2, size_average=True)
    assert jnp.allclose(loss2, ref2, rtol=1e-5, atol=1e-6), (loss2, ref2)

    print("KERNEL_OK")
</pallas_src>

<mosaic_0001>
module attributes {stable_mosaic.version = 11 : i64} {
  func.func @_init_loss_kernel(%arg0: i32, %arg1: i32, %arg2: memref<16x128xf32, #tpu.memory_space<vmem>>, %arg3: memref<16x128xf32, #tpu.memory_space<vmem>>, %arg4: memref<16x128xf32, #tpu.memory_space<vmem>>, %arg5: memref<1x8x128xf32, #tpu.memory_space<vmem>>) attributes {dimension_semantics = [#tpu.dimension_semantics<parallel>, #tpu.dimension_semantics<arbitrary>], iteration_bounds = array<i64: 1, 1>, scalar_prefetch = 0 : i64, scratch_operands = 0 : i64, tpu.core_type = #tpu.core_type<tc>, window_params = [{transform_indices = @transform_0, window_bounds = array<i64: 16, 128>}, {transform_indices = @transform_1, window_bounds = array<i64: 16, 128>}, {transform_indices = @transform_2, window_bounds = array<i64: 16, 128>}, {transform_indices = @transform_3, window_bounds = array<i64: 1, 8, 128>}]} {
    %c0_i32 = arith.constant 0 : i32
    %0 = arith.cmpi eq, %arg1, %c0_i32 : i32
    %1 = arith.extui %0 : i1 to i32
    %c0_i32_0 = arith.constant 0 : i32
    %2 = arith.cmpi ne, %1, %c0_i32_0 : i32
    scf.if %2 {
      %cst_16 = arith.constant 0.000000e+00 : f32
      %28 = vector.broadcast %cst_16 : f32 to vector<8x128xf32>
      %c0_17 = arith.constant 0 : index
      %c0_18 = arith.constant 0 : index
      %c0_19 = arith.constant 0 : index
      %29 = vector.load %arg5[%c0_17, %c0_18, %c0_19] : memref<1x8x128xf32, #tpu.memory_space<vmem>>, vector<1x8x128xf32>
      %30 = vector.shape_cast %29 : vector<1x8x128xf32> to vector<8x128xf32>
      %31 = vector.shape_cast %28 : vector<8x128xf32> to vector<1x8x128xf32>
      tpu.vector_store %arg5[%c0_17, %c0_18, %c0_19], %31 {strides = array<i32>} : memref<1x8x128xf32, #tpu.memory_space<vmem>>, vector<1x8x128xf32>,
    } else {
    }
    %c0 = arith.constant 0 : index
    %c0_1 = arith.constant 0 : index
    %3 = vector.load %arg2[%c0, %c0_1] : memref<16x128xf32, #tpu.memory_space<vmem>>, vector<16x128xf32>
    %c0_2 = arith.constant 0 : index
    %c0_3 = arith.constant 0 : index
    %4 = vector.load %arg3[%c0_2, %c0_3] : memref<16x128xf32, #tpu.memory_space<vmem>>, vector<16x128xf32>
    %c0_4 = arith.constant 0 : index
    %c0_5 = arith.constant 0 : index
    %5 = vector.load %arg4[%c0_4, %c0_5] : memref<16x128xf32, #tpu.memory_space<vmem>>, vector<16x128xf32>
    %6 = arith.subf %4, %5 : vector<16x128xf32>
    %7 = math.absf %6 : vector<16x128xf32>
    %cst = arith.constant 0.00999999977 : f32
    %8 = vector.broadcast %cst : f32 to vector<16x128xf32>
    %9 = arith.subf %7, %8 : vector<16x128xf32>
    %cst_6 = arith.constant 1.000000e+02 : f32
    %10 = vector.broadcast %cst_6 : f32 to vector<16x128xf32>
    %11 = arith.mulf %9, %10 : vector<16x128xf32>
    %12 = math.exp %11 : vector<16x128xf32>
    %cst_7 = arith.constant 1.000000e+00 : f32
    %13 = vector.broadcast %cst_7 : f32 to vector<16x128xf32>
    %14 = arith.addf %13, %12 : vector<16x128xf32>
    %cst_8 = arith.constant 1.000000e+00 : f32
    %15 = vector.broadcast %cst_8 : f32 to vector<16x128xf32>
    %16 = arith.divf %15, %14 : vector<16x128xf32>
    %17 = arith.subf %3, %5 : vector<16x128xf32>
    %18 = arith.mulf %17, %16 : vector<16x128xf32>
    %19 = arith.mulf %18, %18 : vector<16x128xf32>
    %c0_9 = arith.constant 0 : index
    %c0_10 = arith.constant 0 : index
    %c0_11 = arith.constant 0 : index
    %20 = vector.load %arg5[%c0_9, %c0_10, %c0_11] : memref<1x8x128xf32, #tpu.memory_space<vmem>>, vector<1x8x128xf32>
    %21 = vector.shape_cast %20 : vector<1x8x128xf32> to vector<8x128xf32>
    %22 = vector.shape_cast %19 : vector<16x128xf32> to vector<2x8x128xf32>
    %cst_12 = arith.constant dense<0.000000e+00> : vector<8x128xf32>
    %23 = vector.multi_reduction <add>, %22, %cst_12 [0] : vector<2x8x128xf32> to vector<8x128xf32>
    %24 = arith.addf %21, %23 : vector<8x128xf32>
    %c0_13 = arith.constant 0 : index
    %c0_14 = arith.constant 0 : index
    %c0_15 = arith.constant 0 : index
    %25 = vector.load %arg5[%c0_13, %c0_14, %c0_15] : memref<1x8x128xf32, #tpu.memory_space<vmem>>, vector<1x8x128xf32>
    %26 = vector.shape_cast %25 : vector<1x8x128xf32> to vector<8x128xf32>
    %27 = vector.shape_cast %24 : vector<8x128xf32> to vector<1x8x128xf32>
    tpu.vector_store %arg5[%c0_13, %c0_14, %c0_15], %27 {strides = array<i32>} : memref<1x8x128xf32, #tpu.memory_space<vmem>>, vector<1x8x128xf32>,
    return
  }
  func.func @transform_0(%arg0: i32, %arg1: i32) -> (i32, i32) {
    %c1_i32 = arith.constant 1 : i32
    %0 = arith.muli %arg0, %c1_i32 : i32
    %1 = arith.addi %0, %arg1 : i32
    %c0_i32 = arith.constant 0 : i32
    %c0_i32_0 = arith.constant 0 : i32
    return %1, %c0_i32 : i32, i32
  }
  func.func @transform_1(%arg0: i32, %arg1: i32) -> (i32, i32) {
    %c1_i32 = arith.constant 1 : i32
    %0 = arith.muli %arg0, %c1_i32 : i32
    %1 = arith.addi %0, %arg1 : i32
    %c0_i32 = arith.constant 0 : i32
    %c0_i32_0 = arith.constant 0 : i32
    return %1, %c0_i32 : i32, i32
  }
  func.func @transform_2(%arg0: i32, %arg1: i32) -> (i32, i32) {
    %c1_i32 = arith.constant 1 : i32
    %0 = arith.muli %arg0, %c1_i32 : i32
    %1 = arith.addi %0, %arg1 : i32
    %c0_i32 = arith.constant 0 : i32
    %c0_i32_0 = arith.constant 0 : i32
    return %1, %c0_i32 : i32, i32
  }
  func.func @transform_3(%arg0: i32, %arg1: i32) -> (i32, i32, i32) {
    %c0_i32 = arith.constant 0 : i32
    %c0_i32_0 = arith.constant 0 : i32
    %c0_i32_1 = arith.constant 0 : i32
    return %arg0, %c0_i32, %c0_i32_0 : i32, i32, i32
  }
}

</mosaic_0001>

<llo_original>
// kernel: tpu_custom_call.1
$region0: #{tpu_custom_call.1}
  #allocation0 [shape = 'u32[]', space=smem, size = 0x4, offset = 0x4, fixed_abs, tag = 'smem constant byte address 0x4 - core index']
  #allocation1 [shape = 'u32[144,128]{1,0:T(1,128)}', space=vmem, size = 0x12000, scoped, tag = 'internal scratch']
  %s0 = inlined_call_operand.hbm [shape: f32[16,128], index: 0, kind: input, shape index: {}]
  %s1 = inlined_call_operand.hbm [shape: f32[16,128], index: 1, kind: input, shape index: {}]
  %s2 = inlined_call_operand.hbm [shape: f32[16,128], index: 2, kind: input, shape index: {}]
  %s3 = inlined_call_operand.hbm [shape: f32[1,8,128], index: 3, kind: output, shape index: {}]
  %s4 = sld [smem:[#allocation0]]
  $region38: #{tpu_custom_call.1} parent=0
    _
  %s6 = ssub.s32 1, %s4
  %s7 = scalar_select 0, %s6, %s4
  $region1: #{tpu_custom_call.1} parent=0
    #allocation2 [shape = 'u8[8192]{0}', space=vmem, size = 0x2000, scoped, tag = 'input window, operand 0, single buffered']
    #allocation3 [shape = 's32[1]{0}', space=sflag, size = 0x4, scoped, tag = 'scoped memory for tpu_custom_call.1']
    #allocation4 [shape = 's32[1]{0}', space=sflag, size = 0x4, scoped, tag = 'scoped memory for tpu_custom_call.1']
    #allocation5 [shape = 'u8[8192]{0}', space=vmem, size = 0x2000, scoped, tag = 'input window, operand 1, single buffered']
    #allocation6 [shape = 's32[1]{0}', space=sflag, size = 0x4, scoped, tag = 'scoped memory for tpu_custom_call.1']
    #allocation7 [shape = 'u8[8192]{0}', space=vmem, size = 0x2000, scoped, tag = 'input window, operand 2, single buffered']
    #allocation8 [shape = 'u8[4096]{0}', space=vmem, size = 0x1000, scoped, tag = 'output window, operand 0, single buffered']
    %8 = vsyncpa [#allocation3], 0
    %9 = vsyncpa [#allocation6], 0
    %10 = vsyncpa [#allocation4], 0
    // Predicated region
    $region2: #{tpu_custom_call.1} parent=1 // pred_check
      _
    $region3: #{tpu_custom_call.1} parent=1 // pred_check_branch
      %12 = sbr.rel (0) target = $region5
    $region4: #{tpu_custom_call.1} parent=1 // pred_region
      %s13 = sadd.s32 0, 0
      %s14 = smul.u32 2, %s13
      %s16 = ssub.s32 256, 256
      %17 = vsyncadd [#allocation3], %s16
      %s18 = smul.addr %s14, 128
      %s19 = scalar_lea.hbm %s0, %s18
      %s20 = sshll.u32 [#allocation2], 4
      %s21 = int_to_ptr.vmem [resolvable:$true] %s20
      %26 = dma.hbm_to_vmem [thread:$0]  %s19, 256, %s21, [#allocation3], 128, 128, 8
    $region5: #{tpu_custom_call.1} parent=1 // pred_fallthru
      _
    // Predicated region
    $region6: #{tpu_custom_call.1} parent=1 // pred_check
      _
    $region7: #{tpu_custom_call.1} parent=1 // pred_check_branch
      %28 = sbr.rel (0) target = $region9
    $region8: #{tpu_custom_call.1} parent=1 // pred_region
      %s29 = sadd.s32 0, 0
      %s30 = smul.u32 2, %s29
      %s32 = ssub.s32 256, 256
      %33 = vsyncadd [#allocation6], %s32
      %s34 = smul.addr %s30, 128
      %s35 = scalar_lea.hbm %s1, %s34
      %s36 = sshll.u32 [#allocation5], 4
      %s37 = int_to_ptr.vmem [resolvable:$true] %s36
      %42 = dma.hbm_to_vmem [thread:$0]  %s35, 256, %s37, [#allocation6], 128, 128, 8
    $region9: #{tpu_custom_call.1} parent=1 // pred_fallthru
      _
    // Predicated region
    $region10: #{tpu_custom_call.1} parent=1 // pred_check
      _
    $region11: #{tpu_custom_call.1} parent=1 // pred_check_branch
      %44 = sbr.rel (0) target = $region13
    $region12: #{tpu_custom_call.1} parent=1 // pred_region
      %s45 = sadd.s32 0, 0
      %s46 = smul.u32 2, %s45
      %s48 = ssub.s32 256, 256
      %49 = vsyncadd [#allocation6], %s48
      %s50 = smul.addr %s46, 128
      %s51 = scalar_lea.hbm %s2, %s50
      %s52 = sshll.u32 [#allocation7], 4
      %s53 = int_to_ptr.vmem [resolvable:$true] %s52
      %58 = dma.hbm_to_vmem [thread:$0]  %s51, 256, %s53, [#allocation6], 128, 128, 8
    $region13: #{tpu_custom_call.1} parent=1 // pred_fallthru
      _
    // Predicated region
    $region14: #{tpu_custom_call.1} parent=1 // pred_check
      _
    $region15: #{tpu_custom_call.1} parent=1 // pred_check_branch
      %60 = sbr.rel (0) target = $region17
    $region16: #{tpu_custom_call.1} parent=1 // pred_region
      %61 = dma.done [#allocation3], 256
    $region17: #{tpu_custom_call.1} parent=1 // pred_fallthru
      _
    // Predicated region
    $region18: #{tpu_custom_call.1} parent=1 // pred_check
      _
    $region19: #{tpu_custom_call.1} parent=1 // pred_check_branch
      %63 = sbr.rel (0) target = $region21
    $region20: #{tpu_custom_call.1} parent=1 // pred_region
      %64 = dma.done [#allocation6], 256
    $region21: #{tpu_custom_call.1} parent=1 // pred_fallthru
      _
    // Predicated region
    $region22: #{tpu_custom_call.1} parent=1 // pred_check
      _
    $region23: #{tpu_custom_call.1} parent=1 // pred_check_branch
      %66 = sbr.rel (0) target = $region25
    $region24: #{tpu_custom_call.1} parent=1 // pred_region
      %67 = dma.done [#allocation6], 256
    $region25: #{tpu_custom_call.1} parent=1 // pred_fallthru
      _
    %s68 = sadd.s32 0, 0
    %s69 = smul.u32 2, %s68
    %s70 = sadd.s32 0, 0
    %s71 = smul.u32 2, %s70
    %s72 = sadd.s32 0, 0
    %s73 = smul.u32 2, %s72
    %p74 = scmp.eq.s32.totalorder 0, 0
    // Predicated region
    $region26: #{tpu_custom_call.1} parent=1 // pred_check
      %p75 = pneg %p74
    $region27: #{tpu_custom_call.1} parent=1 // pred_check_branch
      %77 = sbr.rel (%p75) target = $region29
    $region28: #{tpu_custom_call.1} parent=1 // pred_region
      %78 = vst [vmem:[#allocation8] sm:$0xff] 0.0
    $region29: #{tpu_custom_call.1} parent=1 // pred_fallthru
      _
    %v79 = vld [vmem:[#allocation2] sm:$0xff]
    %v80 = vld [vmem:[#allocation2 + $0x8] sm:$0xff]
    %v81 = vld [vmem:[#allocation5] sm:$0xff]
    %v82 = vld [vmem:[#allocation5 + $0x8] sm:$0xff]
    %v83 = vld [vmem:[#allocation7] sm:$0xff]
    %v84 = vld [vmem:[#allocation7 + $0x8] sm:$0xff]
    %v85 = vsub.f32 %v81, %v83
    %v86 = vsub.f32 %v82, %v84
    %v87 = vand.u32 2147483647, %v85
    %v88 = vand.u32 2147483647, %v86
    %v89 = vsub.f32 %v87, 0.01
    %v90 = vsub.f32 %v88, 0.01
    %v91 = vmul.f32 %v89, 100.0
    %v92 = vmul.f32 %v90, 100.0
    %v93 = vmul.f32 %v91, 1.442695
    %v94 = vpow.pop %v93
    %v95 = vmul.f32 %v92, 1.442695
    %v96 = vpow.pop %v95
    %v97 = vadd.f32 %v94, 1.0
    %v98 = vadd.f32 %v96, 1.0
    %v99 = vrcp.pop %v97
    %v100 = vmul.f32 1.0, %v99
    %v101 = vrcp.pop %v98
    %v102 = vmul.f32 1.0, %v101
    %v103 = vsub.f32 %v79, %v83
    %v104 = vsub.f32 %v80, %v84
    %v105 = vmul.f32 %v103, %v100
    %v106 = vmul.f32 %v104, %v102
    %v107 = vmul.f32 %v105, %v105
    %v108 = vmul.f32 %v106, %v106
    %v109 = vld [vmem:[#allocation8] sm:$0xff]
    %v110 = vadd.f32 %v107, %v108
    %v111 = vadd.f32 %v109, %v110
    %112 = vst [vmem:[#allocation8] sm:$0xff] %v111
    // Predicated region
    $region30: #{tpu_custom_call.1} parent=1 // pred_check
      _
    $region31: #{tpu_custom_call.1} parent=1 // pred_check_branch
      %114 = sbr.rel (0) target = $region33
    $region32: #{tpu_custom_call.1} parent=1 // pred_region
      %s116 = ssub.s32 128, 128
      %117 = vsyncadd [#allocation4], %s116
      %s119 = sshll.u32 [#allocation8], 4
      %s120 = int_to_ptr.vmem [resolvable:$true] %s119
      %122 = dma.vmem_to_hbm [thread:$0]  %s120, 128, %s3, [#allocation4]
    $region33: #{tpu_custom_call.1} parent=1 // pred_fallthru
      _
    // Predicated region
    $region34: #{tpu_custom_call.1} parent=1 // pred_check
      _
    $region35: #{tpu_custom_call.1} parent=1 // pred_check_branch
      %124 = sbr.rel (0) target = $region37
    $region36: #{tpu_custom_call.1} parent=1 // pred_region
      %125 = dma.done [#allocation4], 128
    $region37: #{tpu_custom_call.1} parent=1 // pred_fallthru
      _
    %126 = vsyncpa [#allocation3], 1
    %127 = vsyncpa [#allocation6], 1
    %128 = vsyncpa [#allocation4], 1

</llo_original>
